<compile_context>
chip_gen: v6e
topology: v6e:2x2x1
jax: 0.10.0
libtpu: 0.0.40
codegen_flags: <defaults>
</compile_context>

<pallas_src>
from functools import partial

import jax
import jax.numpy as jnp
from jax.experimental import pallas as pl
from jax.experimental.pallas import tpu as pltpu

# ---- model dims (CartPole-v0) -------------------------------------------------
S_SIZE = 4    # env.observation_space.shape[0]
H_SIZE = 16
A_SIZE = 2

_SUB = 8                 # sublane granularity
_DEFAULT_TILE_B = 512    # batch-tile rows (multiple of 256 for v6e/v7x MXU)


def _round_up(n, m):
    return ((n + m - 1) // m) * m


def _agent_kernel(x_ref, w1_ref, b1_ref, w2_ref, b2_ref, o_ref):
    # fc1 + relu   (x @ W1 + b1)
    h = jnp.dot(x_ref[...], w1_ref[...], preferred_element_type=jnp.float32)
    h = jnp.maximum(h + b1_ref[...], 0.0)
    # fc2 + sigmoid
    z = jnp.dot(h, w2_ref[...], preferred_element_type=jnp.float32) + b2_ref[...]
    o_ref[...] = jax.nn.sigmoid(z)


def prepare_params(w1, b1, w2, b2):
    """One-time prep of the policy weights (cast + bias reshape).

    Weights are stored as [in_features, out_features] (transposed vs. the
    torch nn.Linear.weight layout), so the kernel computes plain x @ W + b.
    Call this once per candidate weight vector, not per forward step.
    """
    return (
        jnp.asarray(w1, jnp.float32),                  # [S, H]
        jnp.asarray(b1, jnp.float32).reshape(1, -1),   # [1, H]
        jnp.asarray(w2, jnp.float32),                  # [H, A]
        jnp.asarray(b2, jnp.float32).reshape(1, -1),   # [1, A]
    )


@partial(jax.jit, static_argnames=("tile",))
def _agent_forward_impl(x, w1, b1, w2, b2, *, tile):
    """x: [B, S_SIZE] f32. Pads to a tile multiple, runs the fused kernel,
    and strips the pad — all inside one jitted executable."""
    B = x.shape[0]
    Bp = _round_up(B, tile)
    grid = (Bp // tile,)

    xp = x
    if Bp != B:
        xp = jnp.pad(xp, ((0, Bp - B), (0, 0)))   # row pad only, only if needed

    out = pl.pallas_call(
        _agent_kernel,
        out_shape=jax.ShapeDtypeStruct((Bp, A_SIZE), jnp.float32),
        grid_spec=pltpu.PrefetchScalarGridSpec(
            num_scalar_prefetch=0,
            grid=grid,
            in_specs=[
                pl.BlockSpec((tile, S_SIZE), lambda i: (i, 0)),     # x batch tile
                pl.BlockSpec((S_SIZE, H_SIZE), lambda i: (0, 0)),   # w1 (full)
                pl.BlockSpec((1, H_SIZE), lambda i: (0, 0)),        # b1 (full)
                pl.BlockSpec((H_SIZE, A_SIZE), lambda i: (0, 0)),   # w2 (full)
                pl.BlockSpec((1, A_SIZE), lambda i: (0, 0)),        # b2 (full)
            ],
            out_specs=pl.BlockSpec((tile, A_SIZE), lambda i: (i, 0)),
        ),
        compiler_params=pltpu.CompilerParams(
            dimension_semantics=("parallel",)),
    )(xp, w1, b1, w2, b2)

    if Bp != B:
        out = out[:B]
    return out


def agent_forward(x, params, *, tile_b=_DEFAULT_TILE_B):
    """x: [B, S_SIZE] float; params = prepare_params(...). Returns [B, A_SIZE] f32."""
    w1, b1, w2, b2 = params
    B = x.shape[0]
    # Batch tile: a multiple of 8 sublanes, no bigger than needed for small B.
    tile = int(min(tile_b, _round_up(B, _SUB)))
    x = jnp.asarray(x, jnp.float32)
    return _agent_forward_impl(x, w1, b1, w2, b2, tile=tile)


def init_params(key):
    """Deterministic init mimicking nn.Linear default (uniform +-1/sqrt(fan_in)).
    Weights stored as [in_features, out_features] (transposed vs. torch)."""
    k1, k2, k3, k4 = jax.random.split(key, 4)
    lim1 = 1.0 / jnp.sqrt(jnp.float32(S_SIZE))
    lim2 = 1.0 / jnp.sqrt(jnp.float32(H_SIZE))
    w1 = jax.random.uniform(k1, (S_SIZE, H_SIZE), jnp.float32, -lim1, lim1)
    b1 = jax.random.uniform(k2, (H_SIZE,), jnp.float32, -lim1, lim1)
    w2 = jax.random.uniform(k3, (H_SIZE, A_SIZE), jnp.float32, -lim2, lim2)
    b2 = jax.random.uniform(k4, (A_SIZE,), jnp.float32, -lim2, lim2)
    return w1, b1, w2, b2


if __name__ == "__main__":
    key = jax.random.PRNGKey(0)
    kx, kx2, kp = jax.random.split(key, 3)

    w1, b1, w2, b2 = init_params(kp)
    params = prepare_params(w1, b1, w2, b2)   # weights prepared once

    # --- small batch (policy-evaluation style): B=2 CartPole states [B, 4] ---
    B = 2
    x = jax.random.normal(kx, (B, S_SIZE), jnp.float32)
    out = jax.block_until_ready(agent_forward(x, params))
    ref = jax.nn.sigmoid(jnp.maximum(x @ w1 + b1, 0.0) @ w2 + b2)
    assert out.shape == (B, A_SIZE)
    assert jnp.allclose(out, ref, atol=1e-5, rtol=1e-5)

    # --- larger batch exercising the tiled "parallel" grid + row-pad path ---
    B2 = 1000
    x2 = jax.random.normal(kx2, (B2, S_SIZE), jnp.float32)
    out2 = jax.block_until_ready(agent_forward(x2, params))
    ref2 = jax.nn.sigmoid(jnp.maximum(x2 @ w1 + b1, 0.0) @ w2 + b2)
    assert out2.shape == (B2, A_SIZE)
    assert jnp.allclose(out2, ref2, atol=1e-5, rtol=1e-5)

    print("KERNEL_OK")
</pallas_src>

<mosaic_0001>
module attributes {stable_mosaic.version = 11 : i64} {
  func.func @_agent_kernel(%arg0: i32, %arg1: memref<8x4xf32, #tpu.memory_space<vmem>>, %arg2: memref<4x16xf32, #tpu.memory_space<vmem>>, %arg3: memref<1x16xf32, #tpu.memory_space<vmem>>, %arg4: memref<16x2xf32, #tpu.memory_space<vmem>>, %arg5: memref<1x2xf32, #tpu.memory_space<vmem>>, %arg6: memref<8x2xf32, #tpu.memory_space<vmem>>) attributes {dimension_semantics = [#tpu.dimension_semantics<parallel>], iteration_bounds = array<i64: 1>, scalar_prefetch = 0 : i64, scratch_operands = 0 : i64, tpu.core_type = #tpu.core_type<tc>, window_params = [{transform_indices = @transform_0, window_bounds = array<i64: 8, 4>}, {pipeline_mode = #tpu.pipeline_mode<synchronous>, transform_indices = @transform_1, window_bounds = array<i64: 4, 16>}, {pipeline_mode = #tpu.pipeline_mode<synchronous>, transform_indices = @transform_2, window_bounds = array<i64: 1, 16>}, {pipeline_mode = #tpu.pipeline_mode<synchronous>, transform_indices = @transform_3, window_bounds = array<i64: 16, 2>}, {pipeline_mode = #tpu.pipeline_mode<synchronous>, transform_indices = @transform_4, window_bounds = array<i64: 1, 2>}, {transform_indices = @transform_5, window_bounds = array<i64: 8, 2>}]} {
    %c0 = arith.constant 0 : index
    %c0_0 = arith.constant 0 : index
    %0 = vector.load %arg1[%c0, %c0_0] : memref<8x4xf32, #tpu.memory_space<vmem>>, vector<8x4xf32>
    %c0_1 = arith.constant 0 : index
    %c0_2 = arith.constant 0 : index
    %1 = vector.load %arg2[%c0_1, %c0_2] : memref<4x16xf32, #tpu.memory_space<vmem>>, vector<4x16xf32>
    %cst = arith.constant dense<0.000000e+00> : vector<8x16xf32>
    %2 = tpu.matmul %0, %1, %cst {dimension_numbers = #tpu.dot_dimension_numbers<[1], [0], [0], [1], [0, 0, 1, 1], [], []>} : vector<8x4xf32>, vector<4x16xf32>, vector<8x16xf32> -> vector<8x16xf32>
    %c0_3 = arith.constant 0 : index
    %c0_4 = arith.constant 0 : index
    %3 = vector.load %arg3[%c0_3, %c0_4] : memref<1x16xf32, #tpu.memory_space<vmem>>, vector<1x16xf32>
    %4 = vector.broadcast %3 : vector<1x16xf32> to vector<8x16xf32>
    %5 = arith.addf %2, %4 : vector<8x16xf32>
    %cst_5 = arith.constant 0.000000e+00 : f32
    %6 = vector.broadcast %cst_5 : f32 to vector<8x16xf32>
    %7 = arith.maximumf %5, %6 : vector<8x16xf32>
    %c0_6 = arith.constant 0 : index
    %c0_7 = arith.constant 0 : index
    %8 = vector.load %arg4[%c0_6, %c0_7] : memref<16x2xf32, #tpu.memory_space<vmem>>, vector<16x2xf32>
    %cst_8 = arith.constant dense<0.000000e+00> : vector<8x2xf32>
    %9 = tpu.matmul %7, %8, %cst_8 {dimension_numbers = #tpu.dot_dimension_numbers<[1], [0], [0], [1], [0, 0, 1, 1], [], []>} : vector<8x16xf32>, vector<16x2xf32>, vector<8x2xf32> -> vector<8x2xf32>
    %c0_9 = arith.constant 0 : index
    %c0_10 = arith.constant 0 : index
    %10 = vector.load %arg5[%c0_9, %c0_10] : memref<1x2xf32, #tpu.memory_space<vmem>>, vector<1x2xf32>
    %11 = vector.broadcast %10 : vector<1x2xf32> to vector<8x2xf32>
    %12 = arith.addf %9, %11 : vector<8x2xf32>
    %13 = arith.negf %12 : vector<8x2xf32>
    %14 = math.exp %13 : vector<8x2xf32>
    %cst_11 = arith.constant 1.000000e+00 : f32
    %15 = vector.broadcast %cst_11 : f32 to vector<8x2xf32>
    %16 = arith.addf %15, %14 : vector<8x2xf32>
    %17 = arith.divf %15, %16 : vector<8x2xf32>
    %c0_12 = arith.constant 0 : index
    %c0_13 = arith.constant 0 : index
    %18 = vector.load %arg6[%c0_12, %c0_13] : memref<8x2xf32, #tpu.memory_space<vmem>>, vector<8x2xf32>
    tpu.vector_store %arg6[%c0_12, %c0_13], %17 {strides = array<i32>} : memref<8x2xf32, #tpu.memory_space<vmem>>, vector<8x2xf32>,
    return
  }
  func.func @transform_0(%arg0: i32) -> (i32, i32) {
    %c0_i32 = arith.constant 0 : i32
    %c0_i32_0 = arith.constant 0 : i32
    return %arg0, %c0_i32 : i32, i32
  }
  func.func @transform_1(%arg0: i32) -> (i32, i32) {
    %c0_i32 = arith.constant 0 : i32
    %c0_i32_0 = arith.constant 0 : i32
    %c0_i32_1 = arith.constant 0 : i32
    return %c0_i32, %c0_i32_0 : i32, i32
  }
  func.func @transform_2(%arg0: i32) -> (i32, i32) {
    %c0_i32 = arith.constant 0 : i32
    %c0_i32_0 = arith.constant 0 : i32
    %c0_i32_1 = arith.constant 0 : i32
    return %c0_i32, %c0_i32_0 : i32, i32
  }
  func.func @transform_3(%arg0: i32) -> (i32, i32) {
    %c0_i32 = arith.constant 0 : i32
    %c0_i32_0 = arith.constant 0 : i32
    %c0_i32_1 = arith.constant 0 : i32
    return %c0_i32, %c0_i32_0 : i32, i32
  }
  func.func @transform_4(%arg0: i32) -> (i32, i32) {
    %c0_i32 = arith.constant 0 : i32
    %c0_i32_0 = arith.constant 0 : i32
    %c0_i32_1 = arith.constant 0 : i32
    return %c0_i32, %c0_i32_0 : i32, i32
  }
  func.func @transform_5(%arg0: i32) -> (i32, i32) {
    %c0_i32 = arith.constant 0 : i32
    %c0_i32_0 = arith.constant 0 : i32
    return %arg0, %c0_i32 : i32, i32
  }
}

</mosaic_0001>

<llo_original>
// kernel: _agent_forward_impl.1
$region0: #{_agent_forward_impl.1}
  #allocation0 [shape = 'u32[]', space=smem, size = 0x4, offset = 0x4, fixed_abs, tag = 'smem constant byte address 0x4 - core index']
  #allocation1 [shape = 'u32[144,128]{1,0:T(1,128)}', space=vmem, size = 0x12000, scoped, tag = 'internal scratch']
  %s0 = inlined_call_operand.vmem [shape: f32[8,4], index: 0, kind: input, shape index: {}]
  %s1 = inlined_call_operand.vmem [shape: f32[4,16], index: 1, kind: input, shape index: {}]
  %s2 = inlined_call_operand.vmem [shape: f32[1,16], index: 2, kind: input, shape index: {}]
  %s3 = inlined_call_operand.vmem [shape: f32[16,2], index: 3, kind: input, shape index: {}]
  %s4 = inlined_call_operand.vmem [shape: f32[1,2], index: 4, kind: input, shape index: {}]
  %s5 = inlined_call_operand.vmem [shape: f32[8,2], index: 5, kind: output, shape index: {}]
  %s6 = sld [smem:[#allocation0]]
  $region30: #{_agent_forward_impl.1} parent=0
    _
  %s8 = ssub.s32 1, %s6
  %s9 = scalar_select 0, %s8, %s6
  // Predicated region
  $region2: #{_agent_forward_impl.1} parent=0 // pred_check
    _
  $region3: #{_agent_forward_impl.1} parent=0 // pred_check_branch
    %11 = sbr.rel (0) target = $region5
  $region4: #{_agent_forward_impl.1} parent=0 // pred_region
    _
  $region5: #{_agent_forward_impl.1} parent=0 // pred_fallthru
    _
  // Predicated region
  $region6: #{_agent_forward_impl.1} parent=0 // pred_check
    _
  $region7: #{_agent_forward_impl.1} parent=0 // pred_check_branch
    %13 = sbr.rel (0) target = $region9
  $region8: #{_agent_forward_impl.1} parent=0 // pred_region
    _
  $region9: #{_agent_forward_impl.1} parent=0 // pred_fallthru
    _
  // Predicated region
  $region10: #{_agent_forward_impl.1} parent=0 // pred_check
    _
  $region11: #{_agent_forward_impl.1} parent=0 // pred_check_branch
    %15 = sbr.rel (0) target = $region13
  $region12: #{_agent_forward_impl.1} parent=0 // pred_region
    _
  $region13: #{_agent_forward_impl.1} parent=0 // pred_fallthru
    _
  // Predicated region
  $region14: #{_agent_forward_impl.1} parent=0 // pred_check
    _
  $region15: #{_agent_forward_impl.1} parent=0 // pred_check_branch
    %17 = sbr.rel (0) target = $region17
  $region16: #{_agent_forward_impl.1} parent=0 // pred_region
    _
  $region17: #{_agent_forward_impl.1} parent=0 // pred_fallthru
    _
  // Predicated region
  $region18: #{_agent_forward_impl.1} parent=0 // pred_check
    _
  $region19: #{_agent_forward_impl.1} parent=0 // pred_check_branch
    %19 = sbr.rel (0) target = $region21
  $region20: #{_agent_forward_impl.1} parent=0 // pred_region
    _
  $region21: #{_agent_forward_impl.1} parent=0 // pred_fallthru
    _
  %v20 = vld [vmem:[%s0] sm:$0xff]
  %v21 = vld [vmem:[%s1] sm:$0xf]
  %v22 = vld [vmem:[%s2] sm:$0x1]
  %v24 = vlaneseq
  %v25 = vshrl.u32 %v24, 7
  %v26 = vsub.s32 0, %v25
  %v27 = vrot.slane %v22, %v26
  %vm29 = vcmask 31744
  %v31 = vsel %vm29, %v20, 0
  %vm33 = vcmask 1043456
  %v35 = vsel %vm33, %v21, 0
  %37 = vmatprep.subr.mxu0 0.0
  %38 = vmatpush1.msra.mxu0 0.0
  %39 = vmatprep.subr.mxu0 0.0
  %40 = vmatpush1.msra.mxu0 0.0
  %41 = vmatprep.subr.mxu0 0.0
  %42 = vmatpush1.msra.mxu0 0.0
  %43 = vmatprep.subr.mxu0 0.0
  %44 = vmatpush1.msra.mxu0 0.0
  %45 = vmatprep.subr.mxu0 0.0
  %46 = vmatpush1.msra.mxu0 0.0
  %47 = vmatprep.subr.mxu0 0.0
  %48 = vmatpush1.msra.mxu0 0.0
  %49 = vmatprep.subr.mxu0 0.0
  %50 = vmatpush1.msra.mxu0 0.0
  %51 = vmatprep.subr.mxu0 0.0
  %52 = vmatpush1.msra.mxu0 0.0
  %53 = vmatprep.subr.mxu0 0.0
  %54 = vmatpush1.msra.mxu0 0.0
  %55 = vmatprep.subr.mxu0 0.0
  %56 = vmatpush1.msra.mxu0 0.0
  %57 = vmatprep.subr.mxu0 0.0
  %58 = vmatpush1.msra.mxu0 0.0
  %59 = vmatprep.subr.mxu0 0.0
  %60 = vmatpush1.msra.mxu0 0.0
  %61 = vmatprep.subr.mxu0 0.0
  %62 = vmatpush1.msra.mxu0 0.0
  %63 = vmatprep.subr.mxu0 0.0
  %64 = vmatpush1.msra.mxu0 0.0
  %65 = vmatprep.subr.mxu0 0.0
  %66 = vmatpush1.msra.mxu0 0.0
  %67 = vmatprep.subr.mxu0 0.0
  %68 = vmatpush1.msra.mxu0 %v35
  %69 = vmatprep.subr.mxu0 0.0
  %70 = vmatpush2.msra.mxu0 0.0
  %71 = vmatprep.subr.mxu0 0.0
  %72 = vmatpush2.msra.mxu0 0.0
  %73 = vmatprep.subr.mxu0 0.0
  %74 = vmatpush2.msra.mxu0 0.0
  %75 = vmatprep.subr.mxu0 0.0
  %76 = vmatpush2.msra.mxu0 0.0
  %77 = vmatprep.subr.mxu0 0.0
  %78 = vmatpush2.msra.mxu0 0.0
  %79 = vmatprep.subr.mxu0 0.0
  %80 = vmatpush2.msra.mxu0 0.0
  %81 = vmatprep.subr.mxu0 0.0
  %82 = vmatpush2.msra.mxu0 0.0
  %83 = vmatprep.subr.mxu0 0.0
  %84 = vmatpush2.msra.mxu0 0.0
  %85 = vmatprep.subr.mxu0 0.0
  %86 = vmatpush2.msra.mxu0 0.0
  %87 = vmatprep.subr.mxu0 0.0
  %88 = vmatpush2.msra.mxu0 0.0
  %89 = vmatprep.subr.mxu0 0.0
  %90 = vmatpush2.msra.mxu0 0.0
  %91 = vmatprep.subr.mxu0 0.0
  %92 = vmatpush2.msra.mxu0 0.0
  %93 = vmatprep.subr.mxu0 0.0
  %94 = vmatpush2.msra.mxu0 0.0
  %95 = vmatprep.subr.mxu0 0.0
  %96 = vmatpush2.msra.mxu0 0.0
  %97 = vmatprep.subr.mxu0 0.0
  %98 = vmatpush2.msra.mxu0 0.0
  %99 = vmatprep.subr.mxu0 0.0
  %100 = vmatpush2.msra.mxu0 0.0
  %101 = vmatprep.mubr.f32.mxu0 0.0
  %102 = vmatmul.mubr.f32.gmra.mxu0 %v31
  %v103 = vpop.f32.mrf.mxu0
  %v104 = vadd.f32 %v27, %v103
  %v105 = vpop.f32.mrf.mxu0
  %106 = vdwg.mxu0
  %v107 = vmax.f32 %v104, 0.0
  %v108 = vld [vmem:[%s3] sm:$0xff]
  %v109 = vld [vmem:[%s3 + $0x8] sm:$0xff]
  %v110 = vld [vmem:[%s4] sm:$0x1]
  %v112 = vlaneseq
  %v113 = vshrl.u32 %v112, 7
  %v114 = vsub.s32 0, %v113
  %v115 = vrot.slane %v110, %v114
  %vm117 = vcmask 130048
  %v119 = vsel %vm117, %v107, 0
  %121 = vmatprep.subr.mxu0 0.0
  %122 = vmatpush1.msra.mxu0 0.0
  %123 = vmatprep.subr.mxu0 0.0
  %124 = vmatpush1.msra.mxu0 0.0
  %125 = vmatprep.subr.mxu0 0.0
  %126 = vmatpush1.msra.mxu0 0.0
  %127 = vmatprep.subr.mxu0 0.0
  %128 = vmatpush1.msra.mxu0 0.0
  %129 = vmatprep.subr.mxu0 0.0
  %130 = vmatpush1.msra.mxu0 0.0
  %131 = vmatprep.subr.mxu0 0.0
  %132 = vmatpush1.msra.mxu0 0.0
  %133 = vmatprep.subr.mxu0 0.0
  %134 = vmatpush1.msra.mxu0 0.0
  %135 = vmatprep.subr.mxu0 0.0
  %136 = vmatpush1.msra.mxu0 0.0
  %137 = vmatprep.subr.mxu0 0.0
  %138 = vmatpush1.msra.mxu0 0.0
  %139 = vmatprep.subr.mxu0 0.0
  %140 = vmatpush1.msra.mxu0 0.0
  %141 = vmatprep.subr.mxu0 0.0
  %142 = vmatpush1.msra.mxu0 0.0
  %143 = vmatprep.subr.mxu0 0.0
  %144 = vmatpush1.msra.mxu0 0.0
  %145 = vmatprep.subr.mxu0 0.0
  %146 = vmatpush1.msra.mxu0 0.0
  %147 = vmatprep.subr.mxu0 0.0
  %148 = vmatpush1.msra.mxu0 0.0
  %149 = vmatprep.subr.mxu0 0.0
  %150 = vmatpush1.msra.mxu0 %v109
  %151 = vmatprep.subr.mxu0 0.0
  %152 = vmatpush1.msra.mxu0 %v108
  %153 = vmatprep.subr.mxu0 0.0
  %154 = vmatpush2.msra.mxu0 0.0
  %155 = vmatprep.subr.mxu0 0.0
  %156 = vmatpush2.msra.mxu0 0.0
  %157 = vmatprep.subr.mxu0 0.0
  %158 = vmatpush2.msra.mxu0 0.0
  %159 = vmatprep.subr.mxu0 0.0
  %160 = vmatpush2.msra.mxu0 0.0
  %161 = vmatprep.subr.mxu0 0.0
  %162 = vmatpush2.msra.mxu0 0.0
  %163 = vmatprep.subr.mxu0 0.0
  %164 = vmatpush2.msra.mxu0 0.0
  %165 = vmatprep.subr.mxu0 0.0
  %166 = vmatpush2.msra.mxu0 0.0
  %167 = vmatprep.subr.mxu0 0.0
  %168 = vmatpush2.msra.mxu0 0.0
  %169 = vmatprep.subr.mxu0 0.0
  %170 = vmatpush2.msra.mxu0 0.0
  %171 = vmatprep.subr.mxu0 0.0
  %172 = vmatpush2.msra.mxu0 0.0
  %173 = vmatprep.subr.mxu0 0.0
  %174 = vmatpush2.msra.mxu0 0.0
  %175 = vmatprep.subr.mxu0 0.0
  %176 = vmatpush2.msra.mxu0 0.0
  %177 = vmatprep.subr.mxu0 0.0
  %178 = vmatpush2.msra.mxu0 0.0
  %179 = vmatprep.subr.mxu0 0.0
  %180 = vmatpush2.msra.mxu0 0.0
  %181 = vmatprep.subr.mxu0 0.0
  %182 = vmatpush2.msra.mxu0 0.0
  %183 = vmatprep.subr.mxu0 0.0
  %184 = vmatpush2.msra.mxu0 0.0
  %185 = vmatprep.mubr.f32.mxu0 0.0
  %186 = vmatmul.mubr.f32.gmra.mxu0 %v119
  %v187 = vpop.f32.mrf.mxu0
  %v188 = vadd.f32 %v115, %v187
  %v189 = vpop.f32.mrf.mxu0
  %190 = vdwg.mxu0
  %v191 = vxor.u32 %v188, 2147483648
  %v192 = vmul.f32 %v191, 1.442695
  %v193 = vpow.pop %v192
  %v194 = vadd.f32 %v193, 1.0
  %v195 = vrcp.pop %v194
  %v196 = vmul.f32 1.0, %v195
  %vm197 = vcmask 15360
  %198 = vst.msk [vmem:[%s5] sm:$0xff] %vm197, %v196
  // Predicated region
  $region22: #{_agent_forward_impl.1} parent=0 // pred_check
    _
  $region23: #{_agent_forward_impl.1} parent=0 // pred_check_branch
    %200 = sbr.rel (0) target = $region25
  $region24: #{_agent_forward_impl.1} parent=0 // pred_region
    _
  $region25: #{_agent_forward_impl.1} parent=0 // pred_fallthru
    _
  // Predicated region
  $region26: #{_agent_forward_impl.1} parent=0 // pred_check
    _
  $region27: #{_agent_forward_impl.1} parent=0 // pred_check_branch
    %202 = sbr.rel (0) target = $region29
  $region28: #{_agent_forward_impl.1} parent=0 // pred_region
    _
  $region29: #{_agent_forward_impl.1} parent=0 // pred_fallthru
    _

</llo_original>
